<compile_context>
chip_gen: v7x
topology: tpu7x:2x2x1
jax: 0.10.0
libtpu: 0.0.40
codegen_flags: <defaults>
</compile_context>

<pallas_src>
import math

import jax
import jax.numpy as jnp
from jax.experimental import pallas as pl
from jax.experimental.pallas import tpu as pltpu

LARGE_NUMBER = 100000000.0


def _pointer_kernel(c, inv_temp):
    def kernel(ref_ref, eq_ref, v_ref, mask_ref, out_ref):
        enc = ref_ref[...].astype(jnp.float32)           # (TB, TS, H)
        eq = eq_ref[...].astype(jnp.float32)             # (TB, H)
        v = v_ref[...].astype(jnp.float32)               # (1, H)

        t = jnp.tanh(enc + eq[:, None, :])               # (TB, TS, H)  EUP tanh
        scores = jnp.sum(t * v, axis=-1)                 # (TB, TS)     lane reduce
        scores = c * jnp.tanh(scores * inv_temp)

        mask = mask_ref[...].astype(jnp.float32)         # (TB, TS)
        out_ref[...] = jnp.clip(scores - LARGE_NUMBER * mask,
                                -LARGE_NUMBER, LARGE_NUMBER)
    return kernel


def _vmem_capacity_bytes():
    """Physical VMEM capacity; conservative fallback (v7x per-TC) if unknown."""
    try:
        return int(pltpu.get_tpu_info().vmem_capacity_bytes)
    except Exception:
        return 64 * 1024 * 1024


def _round_down(x, m):
    return (x // m) * m


def _pick_tiles(B, S, H, itemsize, stream_budget_bytes):
    """Choose (tb, ts) so the per-step encoded working set (double-buffered
    streamed input + ~2 f32-sized temporaries) stays within stream_budget_bytes
    while satisfying TPU (8, 128) block rules (or full-dim blocks)."""
    # Effective VMEM bytes per encoded element per grid step.
    eff_bytes_per_elem = 2 * itemsize + 2 * 4
    max_tile_elems = max(1, stream_budget_bytes // eff_bytes_per_elem)

    # Minimum legal tiles.
    tb = B if B <= 8 else 8
    ts = S if S <= 128 else 128

    # Grow the seq tile first (lane-dense output, better DMA amortization).
    if S > 128:
        cap_ts = max(128, _round_down(max_tile_elems // max(1, tb * H), 128))
        ts = S if cap_ts >= S else cap_ts
    # Then grow the batch tile with ts fixed (never re-inflates past the cap).
    if B > 8:
        cap_tb = max(8, _round_down(max_tile_elems // max(1, ts * H), 8))
        tb = B if cap_tb >= B else cap_tb

    return tb, ts


def _estimate_vmem_bytes(tb, ts, H, enc_itemsize, mask_itemsize):
    enc_io = 2 * tb * ts * H * enc_itemsize      # double-buffered streamed input
    f32_tmp = 2 * tb * ts * H * 4                # upcast slab + tanh result
    eq_io = 2 * tb * H * 4
    v_io = 2 * H * 4
    mask_io = 2 * tb * ts * mask_itemsize
    out_io = 2 * tb * ts * 4
    return enc_io + f32_tmp + eq_io + v_io + mask_io + out_io


def pointer_forward(encoded_ref, query, mask, w_q_weight, v, c=10.0, temp=1.0,
                    stream_dtype=None):
    """encoded_ref: (B,S,H), query: (B,Q), mask: (B,S),
       w_q_weight: (H,Q) (PyTorch Linear layout), v: (H,).
       stream_dtype: optional narrow dtype (e.g. jnp.bfloat16) to stream
       encoded_ref in; the kernel upcasts per-vreg (HBM-bound workload)."""
    B, S, H = encoded_ref.shape

    if stream_dtype is not None:
        encoded_ref = encoded_ref.astype(stream_dtype)

    # Hoist the degenerate (B,Q)@(Q,H) projection into a single XLA matmul.
    eq = jnp.dot(query.astype(jnp.float32),
                 w_q_weight.T.astype(jnp.float32),
                 preferred_element_type=jnp.float32)      # (B, H)
    v2 = v.reshape(1, H).astype(jnp.float32)              # (1, H)

    enc_isz = jnp.dtype(encoded_ref.dtype).itemsize
    mask_isz = jnp.dtype(mask.dtype).itemsize

    # VMEM-capacity-aware budgets: scoped limit ~half of physical
    # (64 MiB on v5e/v6e's 128 MiB parts, 32 MiB on v7x's 64 MiB),
    # encoded streaming budget is half of that.
    cap = _vmem_capacity_bytes()
    base_limit = max(16 << 20, min(cap // 2, 64 << 20))
    tb, ts = _pick_tiles(B, S, H, enc_isz, base_limit // 2)

    n_b = pl.cdiv(B, tb)
    n_s = pl.cdiv(S, ts)

    # v7x: 2 TensorCores are fed by sharding parallel grid axes. If everything
    # landed in a single grid step but seq is splittable, use >=2 seq blocks
    # (negligible extra step overhead on single-TC v5e/v6e).
    if n_b * n_s == 1 and S >= 256:
        ts = min(S, ((-(-S // 2)) + 127) // 128 * 128)
        n_s = pl.cdiv(S, ts)

    est = _estimate_vmem_bytes(tb, ts, H, enc_isz, mask_isz)
    vmem_limit = int(min(cap, max(base_limit, est + (8 << 20))))

    # Put the grid axis with the most blocks first (better 2-TC sharding).
    seq_major = n_s >= n_b
    if seq_major:
        grid = (n_s, n_b)
        enc_map = lambda si, bi: (bi, si, 0)
        eq_map = lambda si, bi: (bi, 0)
        v_map = lambda si, bi: (0, 0)
        bs_map = lambda si, bi: (bi, si)
    else:
        grid = (n_b, n_s)
        enc_map = lambda bi, si: (bi, si, 0)
        eq_map = lambda bi, si: (bi, 0)
        v_map = lambda bi, si: (0, 0)
        bs_map = lambda bi, si: (bi, si)

    grid_spec = pltpu.PrefetchScalarGridSpec(
        num_scalar_prefetch=0,
        grid=grid,
        in_specs=[
            pl.BlockSpec((tb, ts, H), enc_map),   # encoded_ref (streamed)
            pl.BlockSpec((tb, H),     eq_map),    # eq (per batch tile)
            pl.BlockSpec((1, H),      v_map),     # v (shared)
            pl.BlockSpec((tb, ts),    bs_map),    # mask
        ],
        out_specs=pl.BlockSpec((tb, ts), bs_map),
    )

    cost = pl.CostEstimate(
        flops=4 * B * S * H + 8 * B * S,
        transcendentals=B * S * H + B * S,
        bytes_accessed=(B * S * H * enc_isz + B * S * mask_isz
                        + B * H * 4 + B * S * 4 + H * 4),
    )

    return pl.pallas_call(
        _pointer_kernel(float(c), 1.0 / float(temp)),
        out_shape=jax.ShapeDtypeStruct((B, S), jnp.float32),
        grid_spec=grid_spec,
        compiler_params=pltpu.CompilerParams(
            dimension_semantics=("parallel", "parallel"),
            vmem_limit_bytes=vmem_limit,
        ),
        cost_estimate=cost,
    )(encoded_ref, eq, v2, mask)


def pointer_forward_ref(encoded_ref, query, mask, w_q_weight, v, c=10.0, temp=1.0):
    eq = query @ w_q_weight.T                              # (B, H)
    scores = jnp.sum(v * jnp.tanh(encoded_ref + eq[:, None, :]), axis=-1)
    scores = c * jnp.tanh(scores / temp)
    return jnp.clip(scores - LARGE_NUMBER * mask, -LARGE_NUMBER, LARGE_NUMBER)


if __name__ == "__main__":
    # Small shapes consistent with the module (query_dim, n_hidden scaled down).
    B, S, Q, H = 2, 8, 32, 128

    key = jax.random.PRNGKey(0)
    k1, k2, k3, k4, k5 = jax.random.split(key, 5)

    # Deterministic parameter init (mimics PyTorch reset_parameters bounds).
    bound_w = 1.0 / math.sqrt(Q)
    w_q_weight = jax.random.uniform(k1, (H, Q), jnp.float32, -bound_w, bound_w)
    v = jax.random.uniform(k2, (H,), jnp.float32, -bound_w, bound_w)

    encoded_ref = jax.random.normal(k3, (B, S, H), jnp.float32)
    query = jax.random.normal(k4, (B, Q), jnp.float32)
    mask = (jax.random.uniform(k5, (B, S)) < 0.3).astype(jnp.float32)

    out = pointer_forward(encoded_ref, query, mask, w_q_weight, v, c=10.0, temp=1.0)
    out = jax.block_until_ready(out)

    ref = pointer_forward_ref(encoded_ref, query, mask, w_q_weight, v, c=10.0, temp=1.0)
    assert out.shape == (B, S)
    assert jnp.allclose(out, ref, atol=1e-4, rtol=1e-4), (out, ref)

    print("KERNEL_OK")
</pallas_src>

<mosaic_0001>
module attributes {stable_mosaic.version = 11 : i64} {
  func.func @kernel(%arg0: i32, %arg1: i32, %arg2: memref<2x8x128xf32, #tpu.memory_space<vmem>>, %arg3: memref<2x128xf32, #tpu.memory_space<vmem>>, %arg4: memref<1x128xf32, #tpu.memory_space<vmem>>, %arg5: memref<2x8xf32, #tpu.memory_space<vmem>>, %arg6: memref<2x8xf32, #tpu.memory_space<vmem>>) attributes {dimension_semantics = [#tpu.dimension_semantics<parallel>, #tpu.dimension_semantics<parallel>], iteration_bounds = array<i64: 1, 1>, scalar_prefetch = 0 : i64, scratch_operands = 0 : i64, tpu.core_type = #tpu.core_type<tc>, window_params = [{transform_indices = @transform_0, window_bounds = array<i64: 2, 8, 128>}, {transform_indices = @transform_1, window_bounds = array<i64: 2, 128>}, {pipeline_mode = #tpu.pipeline_mode<synchronous>, transform_indices = @transform_2, window_bounds = array<i64: 1, 128>}, {transform_indices = @transform_3, window_bounds = array<i64: 2, 8>}, {transform_indices = @transform_4, window_bounds = array<i64: 2, 8>}]} {
    %c0 = arith.constant 0 : index
    %c0_0 = arith.constant 0 : index
    %c0_1 = arith.constant 0 : index
    %0 = vector.load %arg2[%c0, %c0_0, %c0_1] : memref<2x8x128xf32, #tpu.memory_space<vmem>>, vector<2x8x128xf32>
    %c0_2 = arith.constant 0 : index
    %c0_3 = arith.constant 0 : index
    %1 = vector.load %arg3[%c0_2, %c0_3] : memref<2x128xf32, #tpu.memory_space<vmem>>, vector<2x128xf32>
    %c0_4 = arith.constant 0 : index
    %c0_5 = arith.constant 0 : index
    %2 = vector.load %arg4[%c0_4, %c0_5] : memref<1x128xf32, #tpu.memory_space<vmem>>, vector<1x128xf32>
    %3 = vector.shape_cast %1 : vector<2x128xf32> to vector<2x1x128xf32>
    %4 = vector.broadcast %3 : vector<2x1x128xf32> to vector<2x8x128xf32>
    %5 = arith.addf %0, %4 : vector<2x8x128xf32>
    %6 = math.tanh %5 : vector<2x8x128xf32>
    %7 = vector.shape_cast %2 : vector<1x128xf32> to vector<1x1x128xf32>
    %8 = vector.broadcast %7 : vector<1x1x128xf32> to vector<2x8x128xf32>
    %9 = arith.mulf %6, %8 : vector<2x8x128xf32>
    %cst = arith.constant dense<0.000000e+00> : vector<2x8xf32>
    %10 = vector.multi_reduction <add>, %9, %cst [2] : vector<2x8x128xf32> to vector<2x8xf32>
    %cst_6 = arith.constant 1.000000e+00 : f32
    %11 = vector.broadcast %cst_6 : f32 to vector<2x8xf32>
    %12 = arith.mulf %10, %11 : vector<2x8xf32>
    %13 = math.tanh %12 : vector<2x8xf32>
    %cst_7 = arith.constant 1.000000e+01 : f32
    %14 = vector.broadcast %cst_7 : f32 to vector<2x8xf32>
    %15 = arith.mulf %14, %13 : vector<2x8xf32>
    %c0_8 = arith.constant 0 : index
    %c0_9 = arith.constant 0 : index
    %16 = vector.load %arg5[%c0_8, %c0_9] : memref<2x8xf32, #tpu.memory_space<vmem>>, vector<2x8xf32>
    %cst_10 = arith.constant 1.000000e+08 : f32
    %17 = vector.broadcast %cst_10 : f32 to vector<2x8xf32>
    %18 = arith.mulf %17, %16 : vector<2x8xf32>
    %19 = arith.subf %15, %18 : vector<2x8xf32>
    %cst_11 = arith.constant -1.000000e+08 : f32
    %cst_12 = arith.constant 1.000000e+08 : f32
    %20 = vector.broadcast %cst_11 : f32 to vector<2x8xf32>
    %21 = arith.maximumf %20, %19 : vector<2x8xf32>
    %22 = vector.broadcast %cst_12 : f32 to vector<2x8xf32>
    %23 = arith.minimumf %22, %21 : vector<2x8xf32>
    %c0_13 = arith.constant 0 : index
    %c0_14 = arith.constant 0 : index
    %24 = vector.load %arg6[%c0_13, %c0_14] : memref<2x8xf32, #tpu.memory_space<vmem>>, vector<2x8xf32>
    tpu.vector_store %arg6[%c0_13, %c0_14], %23 {strides = array<i32>} : memref<2x8xf32, #tpu.memory_space<vmem>>, vector<2x8xf32>,
    return
  }
  func.func @transform_0(%arg0: i32, %arg1: i32) -> (i32, i32, i32) {
    %c0_i32 = arith.constant 0 : i32
    %c0_i32_0 = arith.constant 0 : i32
    return %arg1, %arg0, %c0_i32 : i32, i32, i32
  }
  func.func @transform_1(%arg0: i32, %arg1: i32) -> (i32, i32) {
    %c0_i32 = arith.constant 0 : i32
    %c0_i32_0 = arith.constant 0 : i32
    return %arg1, %c0_i32 : i32, i32
  }
  func.func @transform_2(%arg0: i32, %arg1: i32) -> (i32, i32) {
    %c0_i32 = arith.constant 0 : i32
    %c0_i32_0 = arith.constant 0 : i32
    %c0_i32_1 = arith.constant 0 : i32
    return %c0_i32, %c0_i32_0 : i32, i32
  }
  func.func @transform_3(%arg0: i32, %arg1: i32) -> (i32, i32) {
    %c0_i32 = arith.constant 0 : i32
    return %arg1, %arg0 : i32, i32
  }
  func.func @transform_4(%arg0: i32, %arg1: i32) -> (i32, i32) {
    %c0_i32 = arith.constant 0 : i32
    return %arg1, %arg0 : i32, i32
  }
}

</mosaic_0001>

<llo_original>
// kernel: tpu_custom_call.1
$region0: #{tpu_custom_call.1}
  #allocation0 [shape = 'u32[]', space=smem, size = 0x4, offset = 0x4, fixed_abs, tag = 'smem constant byte address 0x4 - core index']
  #allocation1 [shape = 'u32[144,128]{1,0:T(1,128)}', space=vmem, size = 0x12000, scoped, tag = 'internal scratch']
  %s0 = inlined_call_operand.hbm [shape: f32[2,8,128], index: 0, kind: input, shape index: {}]
  %s1 = inlined_call_operand.vmem [shape: f32[2,128], index: 1, kind: input, shape index: {}]
  %s2 = inlined_call_operand.vmem [shape: f32[1,128], index: 2, kind: input, shape index: {}]
  %s3 = inlined_call_operand.vmem [shape: f32[2,8], index: 3, kind: input, shape index: {}]
  %s4 = inlined_call_operand.hbm [shape: f32[2,8], index: 4, kind: output, shape index: {}]
  %s5 = sld [smem:[#allocation0]]
  $region30: #{tpu_custom_call.1} parent=0
    _
  %s7 = ssub.s32 1, %s5
  %s8 = scalar_select 0, %s7, %s5
  $region1: #{tpu_custom_call.1} parent=0
    #allocation2 [shape = 'u8[8192]{0}', space=vmem, size = 0x2000, scoped, tag = 'input window, operand 0, single buffered']
    #allocation3 [shape = 's32[1]{0}', space=sflag, size = 0x4, scoped, tag = 'scoped memory for tpu_custom_call.1']
    #allocation4 [shape = 's32[1]{0}', space=sflag, size = 0x4, scoped, tag = 'scoped memory for tpu_custom_call.1']
    #allocation5 [shape = 'u8[1024]{0}', space=vmem, size = 0x400, scoped, tag = 'output window, operand 0, single buffered']
    %9 = vsyncpa [#allocation3], 0
    %10 = vsyncpa [#allocation4], 0
    // Predicated region
    $region2: #{tpu_custom_call.1} parent=1 // pred_check
      _
    $region3: #{tpu_custom_call.1} parent=1 // pred_check_branch
      %12 = sbr.rel (0) target = $region5
    $region4: #{tpu_custom_call.1} parent=1 // pred_region
      %s14 = ssub.s32 256, 256
      %15 = vsyncadd [#allocation3], %s14
      %s16 = sshll.u32 [#allocation2], 4
      %s17 = int_to_ptr.vmem [resolvable:$true] %s16
      %22 = dma.hbm_to_vmem [thread:$0]  %s0, 256, %s17, [#allocation3], 128, 128, 8
    $region5: #{tpu_custom_call.1} parent=1 // pred_fallthru
      _
    // Predicated region
    $region6: #{tpu_custom_call.1} parent=1 // pred_check
      _
    $region7: #{tpu_custom_call.1} parent=1 // pred_check_branch
      %24 = sbr.rel (0) target = $region9
    $region8: #{tpu_custom_call.1} parent=1 // pred_region
      _
    $region9: #{tpu_custom_call.1} parent=1 // pred_fallthru
      _
    // Predicated region
    $region10: #{tpu_custom_call.1} parent=1 // pred_check
      _
    $region11: #{tpu_custom_call.1} parent=1 // pred_check_branch
      %26 = sbr.rel (0) target = $region13
    $region12: #{tpu_custom_call.1} parent=1 // pred_region
      _
    $region13: #{tpu_custom_call.1} parent=1 // pred_fallthru
      _
    // Predicated region
    $region14: #{tpu_custom_call.1} parent=1 // pred_check
      _
    $region15: #{tpu_custom_call.1} parent=1 // pred_check_branch
      %28 = sbr.rel (0) target = $region17
    $region16: #{tpu_custom_call.1} parent=1 // pred_region
      _
    $region17: #{tpu_custom_call.1} parent=1 // pred_fallthru
      _
    // Predicated region
    $region18: #{tpu_custom_call.1} parent=1 // pred_check
      _
    $region19: #{tpu_custom_call.1} parent=1 // pred_check_branch
      %30 = sbr.rel (0) target = $region21
    $region20: #{tpu_custom_call.1} parent=1 // pred_region
      %31 = dma.done [#allocation3], 256
    $region21: #{tpu_custom_call.1} parent=1 // pred_fallthru
      _
    %v32 = vld [vmem:[#allocation2] sm:$0xff]
    %v33 = vld [vmem:[#allocation2 + $0x8] sm:$0xff]
    %v34 = vld [vmem:[%s1] sm:$0x3]
    %v35 = vld [vmem:[%s2] sm:$0x1]
    %v38 = vunpack.c.l.s4 1966171168
    %v39 = vunpack.c.0.s8 %v38
    %v40 = vlaneseq
    %v41 = vshrl.u32 %v40, 7
    %v42 = vsub.s32 %v39, %v41
    %v43 = vrot.slane %v34, %v42
    %v44 = vcombine.high %v43, %v43
    %v46 = vunpack.c.l.s4 1966171168
    %v47 = vunpack.c.0.s8 %v46
    %v48 = vlaneseq
    %v49 = vshrl.u32 %v48, 7
    %v50 = vsub.s32 %v47, %v49
    %v51 = vrot.slane %v43, %v50
    %v53 = vunpack.c.l.s4 1966171168
    %v54 = vunpack.c.0.s8 %v53
    %v55 = vlaneseq
    %v56 = vshrl.u32 %v55, 7
    %v57 = vsub.s32 %v54, %v56
    %v58 = vrot.slane %v44, %v57
    %v59 = vlaneseq
    %v60 = vshrl.u32 %v59, 7
    %v61 = vsub.s32 0, %v60
    %v62 = vrot.slane %v51, %v61
    %v63 = vlaneseq
    %v64 = vshrl.u32 %v63, 7
    %v65 = vsub.s32 0, %v64
    %v66 = vrot.slane %v58, %v65
    %v69 = vadd.f32 %v32, %v62
    %v70 = vadd.f32 %v33, %v66
    %v71 = vtanh.pop %v69
    %v72 = vtanh.pop %v70
    %v74 = vlaneseq
    %v75 = vshrl.u32 %v74, 7
    %v76 = vsub.s32 0, %v75
    %v77 = vrot.slane %v35, %v76
    %v79 = vmul.f32 %v71, %v77
    %v80 = vmul.f32 %v72, %v77
    %81 = vadd.xlane.f32.xlu0 %v79
    %v82 = vpop.xlane.xlu0 %81
    %83 = vadd.xlane.f32.xlu0 %v80
    %v84 = vpop.xlane.xlu0 %83
    %v85 = vtanh.pop %v82
    %v86 = vtanh.pop %v84
    %v87 = vmul.f32 %v85, 10.0
    %v88 = vmul.f32 %v86, 10.0
    %v89 = vld [vmem:[%s3] sm:$0x3]
    %v90 = vmul.f32 %v89, 1e+08
    %v92 = vlaneseq
    %v93 = vshrl.u32 %v92, 7
    %v94 = vsub.s32 0, %v93
    %v95 = vrot.slane %v90, %v94
    %97 = vbcast.lane.b32.xlu0 %v95, 256
    %v98 = vpop.permute.xlu0 %97
    %v99 = vlaneseq
    %v100 = vshrl.u32 %v99, 7
    %v101 = vsub.s32 1, %v100
    %v102 = vrot.slane %v90, %v101
    %104 = vbcast.lane.b32.xlu0 %v102, 256
    %v105 = vpop.permute.xlu0 %104
    %v108 = vsub.f32 %v87, %v98
    %v109 = vsub.f32 %v88, %v105
    %v110 = vmax.f32 %v108, -1e+08
    %v111 = vmax.f32 %v109, -1e+08
    %v112 = vmin.f32 %v110, 1e+08
    %v113 = vmin.f32 %v111, 1e+08
    %116 = vset.pattern.permute.xlu0 0
    %117 = vperm.xlu0 %116, %v112
    %v118 = vpop.permute.xlu0 %117
    %119 = vset.pattern.permute.xlu0 0
    %120 = vperm.xlu0 %119, %v113
    %v121 = vpop.permute.xlu0 %120
    %v122 = vlaneseq
    %v123 = vand.u32 %v122, 127
    %v124 = vlaneseq
    %v125 = vshrl.u32 %v124, 7
    %v126 = vsub.s32 %v123, %v125
    %v127 = vrot.slane %v118, %v126
    %v128 = vlaneseq
    %v129 = vshrl.u32 %v128, 7
    %v130 = vsub.s32 %v123, %v129
    %v131 = vrot.slane %v121, %v130
    %vm132 = vcmask 1041409
    %v133 = vsel %vm132, %v131, %v127
    %vm135 = vcmask 58368
    %136 = vst.msk [vmem:[#allocation5] sm:$0x3] %vm135, %v133
    // Predicated region
    $region22: #{tpu_custom_call.1} parent=1 // pred_check
      _
    $region23: #{tpu_custom_call.1} parent=1 // pred_check_branch
      %138 = sbr.rel (0) target = $region25
    $region24: #{tpu_custom_call.1} parent=1 // pred_region
      %s140 = ssub.s32 32, 32
      %141 = vsyncadd [#allocation4], %s140
      %s143 = sshll.u32 [#allocation5], 4
      %s144 = int_to_ptr.vmem [resolvable:$true] %s143
      %146 = dma.vmem_to_hbm [thread:$0]  %s144, 32, %s4, [#allocation4]
    $region25: #{tpu_custom_call.1} parent=1 // pred_fallthru
      _
    // Predicated region
    $region26: #{tpu_custom_call.1} parent=1 // pred_check
      _
    $region27: #{tpu_custom_call.1} parent=1 // pred_check_branch
      %148 = sbr.rel (0) target = $region29
    $region28: #{tpu_custom_call.1} parent=1 // pred_region
      %149 = dma.done [#allocation4], 32
    $region29: #{tpu_custom_call.1} parent=1 // pred_fallthru
      _
    %150 = vsyncpa [#allocation3], 1
    %151 = vsyncpa [#allocation4], 1

</llo_original>
